<compile_context>
chip_gen: v7x
topology: tpu7x:2x2x1
jax: 0.10.0
libtpu: 0.0.40
codegen_flags: <defaults>
</compile_context>

<pallas_src>
import jax
import jax.numpy as jnp
from jax.experimental import pallas as pl
from jax.experimental.pallas import tpu as pltpu


def _avgpool_kernel(x_ref, pwt_ref, o_ref):
    # x_ref:   (Bnc, H, W)   batch of (n*c) slabs
    # pwt_ref: (W, Wo)       column block-averaging matrix, entries 1/p^2
    # o_ref:   (Bnc, Ho, Wo)
    bnc, h, w = x_ref.shape
    _, ho, wo = o_ref.shape
    p = h // ho

    # W (lane) reduction: one large MXU matmul over the whole slab block.
    x2 = x_ref[...].reshape(bnc * h, w)                        # (Bnc*H, W)
    t = jnp.dot(x2, pwt_ref[...],
                preferred_element_type=jnp.float32)            # (Bnc*H, Wo)

    # H reduction on the p-times-smaller intermediate: sublane sum over p.
    t4 = t.reshape(bnc, ho, p, wo)                             # (Bnc, Ho, p, Wo)
    o_ref[...] = t4.sum(axis=2).astype(o_ref.dtype)            # (Bnc, Ho, Wo)


def _choose_block_slabs(nc, h, w, itemsize=4, budget_bytes=20 << 20,
                        max_block=512):
    # Per-slab VMEM cost: double-buffered input (2*H*W) plus the lane-padded
    # matmul intermediate (~H*128 lanes, counted twice for slack).
    per_slab = 2 * h * w * itemsize + 2 * h * 128 * itemsize
    bnc = max(1, budget_bytes // per_slab)
    bnc = min(bnc, max_block, nc)
    # Keep at least 2 grid blocks when possible so both TensorCores of a
    # megacore part get work under dimension_semantics=("parallel",).
    if nc >= 2:
        bnc = min(bnc, pl.cdiv(nc, 2))
    return max(1, int(bnc))


def avg_pool2d_pallas(x, pooling_size=32, block_slabs=None):
    """x: (N, C, H, W) float32 -> (N, C, H//p, W//p), == nn.AvgPool2d(p)(x)."""
    N, C, H, W = x.shape
    p = pooling_size
    assert H % p == 0 and W % p == 0, "H and W must be divisible by pooling_size"
    Ho, Wo = H // p, W // p
    NC = N * C

    # Column block-averaging matrix; 1/p^2 folds both averaging stages so the
    # later H reduction is a plain sum.
    cols = jnp.arange(W) // p
    pwt = (cols[:, None] == jnp.arange(Wo)[None, :]).astype(jnp.float32)
    pwt = pwt * jnp.float32(1.0 / (p * p))                     # (W, Wo)

    bnc = block_slabs if block_slabs is not None else _choose_block_slabs(NC, H, W)
    num_blocks = pl.cdiv(NC, bnc)
    NC_pad = num_blocks * bnc

    x_flat = x.reshape(NC, H, W)
    if NC_pad != NC:
        x_flat = jnp.pad(x_flat, ((0, NC_pad - NC), (0, 0), (0, 0)))

    itemsize = x.dtype.itemsize
    cost = pl.CostEstimate(
        flops=2 * NC_pad * H * W * Wo + NC_pad * H * Wo,
        transcendentals=0,
        bytes_accessed=(NC_pad * H * W + NC_pad * Ho * Wo + W * Wo) * itemsize,
    )

    out_flat = pl.pallas_call(
        _avgpool_kernel,
        out_shape=jax.ShapeDtypeStruct((NC_pad, Ho, Wo), x.dtype),
        grid_spec=pltpu.PrefetchScalarGridSpec(
            num_scalar_prefetch=0,
            grid=(num_blocks,),
            in_specs=[
                pl.BlockSpec((bnc, H, W), lambda i: (i, 0, 0)),
                pl.BlockSpec((W, Wo), lambda i: (0, 0)),
            ],
            out_specs=pl.BlockSpec((bnc, Ho, Wo), lambda i: (i, 0, 0)),
        ),
        compiler_params=pltpu.CompilerParams(
            dimension_semantics=("parallel",),
            vmem_limit_bytes=48 << 20,
        ),
        cost_estimate=cost,
    )(x_flat, pwt)

    return out_flat[:NC].reshape(N, C, Ho, Wo)


if __name__ == "__main__":
    # Small shapes consistent with the module (AvgPool2d(32) needs spatial
    # dims divisible by 32): N*C*H*W -> N*C*(H/32)*(W/32).
    N, C, H, W = 2, 4, 64, 64
    pooling_size = 32

    key = jax.random.PRNGKey(0)
    x = jax.random.normal(key, (N, C, H, W), dtype=jnp.float32)

    out = avg_pool2d_pallas(x, pooling_size=pooling_size)
    out = jax.block_until_ready(out)

    # Pure-JAX reference (same semantics as nn.AvgPool2d(pooling_size)).
    ref = x.reshape(N, C, H // pooling_size, pooling_size,
                    W // pooling_size, pooling_size).mean(axis=(3, 5))
    assert out.shape == (N, C, H // pooling_size, W // pooling_size)
    assert jnp.allclose(out, ref, atol=1e-5, rtol=1e-5)

    print("KERNEL_OK")
</pallas_src>

<mosaic_0001>
module attributes {stable_mosaic.version = 11 : i64} {
  func.func @_avgpool_kernel(%arg0: i32, %arg1: memref<4x64x64xf32, #tpu.memory_space<vmem>>, %arg2: memref<64x2xf32, #tpu.memory_space<vmem>>, %arg3: memref<4x2x2xf32, #tpu.memory_space<vmem>>) attributes {dimension_semantics = [#tpu.dimension_semantics<parallel>], iteration_bounds = array<i64: 2>, scalar_prefetch = 0 : i64, scratch_operands = 0 : i64, tpu.core_type = #tpu.core_type<tc>, window_params = [{transform_indices = @transform_0, window_bounds = array<i64: 4, 64, 64>}, {pipeline_mode = #tpu.pipeline_mode<synchronous>, transform_indices = @transform_1, window_bounds = array<i64: 64, 2>}, {transform_indices = @transform_2, window_bounds = array<i64: 4, 2, 2>}]} {
    %c0 = arith.constant 0 : index
    %c0_0 = arith.constant 0 : index
    %c0_1 = arith.constant 0 : index
    %0 = vector.load %arg1[%c0, %c0_0, %c0_1] : memref<4x64x64xf32, #tpu.memory_space<vmem>>, vector<4x64x64xf32>
    %1 = vector.shape_cast %0 : vector<4x64x64xf32> to vector<256x64xf32>
    %c0_2 = arith.constant 0 : index
    %c0_3 = arith.constant 0 : index
    %2 = vector.load %arg2[%c0_2, %c0_3] : memref<64x2xf32, #tpu.memory_space<vmem>>, vector<64x2xf32>
    %cst = arith.constant dense<0.000000e+00> : vector<256x2xf32>
    %3 = tpu.matmul %1, %2, %cst {dimension_numbers = #tpu.dot_dimension_numbers<[1], [0], [0], [1], [0, 0, 1, 1], [], []>} : vector<256x64xf32>, vector<64x2xf32>, vector<256x2xf32> -> vector<256x2xf32>
    %4 = vector.shape_cast %3 : vector<256x2xf32> to vector<4x2x32x2xf32>
    %cst_4 = arith.constant dense<0.000000e+00> : vector<4x2x2xf32>
    %5 = vector.multi_reduction <add>, %4, %cst_4 [2] : vector<4x2x32x2xf32> to vector<4x2x2xf32>
    %c0_5 = arith.constant 0 : index
    %c0_6 = arith.constant 0 : index
    %c0_7 = arith.constant 0 : index
    %6 = vector.load %arg3[%c0_5, %c0_6, %c0_7] : memref<4x2x2xf32, #tpu.memory_space<vmem>>, vector<4x2x2xf32>
    tpu.vector_store %arg3[%c0_5, %c0_6, %c0_7], %5 {strides = array<i32>} : memref<4x2x2xf32, #tpu.memory_space<vmem>>, vector<4x2x2xf32>,
    return
  }
  func.func @transform_0(%arg0: i32) -> (i32, i32, i32) {
    %c0_i32 = arith.constant 0 : i32
    %c0_i32_0 = arith.constant 0 : i32
    %c0_i32_1 = arith.constant 0 : i32
    return %arg0, %c0_i32, %c0_i32_0 : i32, i32, i32
  }
  func.func @transform_1(%arg0: i32) -> (i32, i32) {
    %c0_i32 = arith.constant 0 : i32
    %c0_i32_0 = arith.constant 0 : i32
    %c0_i32_1 = arith.constant 0 : i32
    return %c0_i32, %c0_i32_0 : i32, i32
  }
  func.func @transform_2(%arg0: i32) -> (i32, i32, i32) {
    %c0_i32 = arith.constant 0 : i32
    %c0_i32_0 = arith.constant 0 : i32
    %c0_i32_1 = arith.constant 0 : i32
    return %arg0, %c0_i32, %c0_i32_0 : i32, i32, i32
  }
}

</mosaic_0001>

<llo_original>
// kernel: tpu_custom_call.1
$region0: #{tpu_custom_call.1}
  #allocation0 [shape = 'u32[]', space=smem, size = 0x4, offset = 0x4, fixed_abs, tag = 'smem constant byte address 0x4 - core index']
  #allocation1 [shape = 'u32[144,128]{1,0:T(1,128)}', space=vmem, size = 0x12000, scoped, tag = 'internal scratch']
  %s0 = inlined_call_operand.hbm [shape: f32[8,64,64], index: 0, kind: input, shape index: {}]
  %s1 = inlined_call_operand.vmem [shape: f32[64,2], index: 1, kind: input, shape index: {}]
  %s2 = inlined_call_operand.vmem [shape: f32[8,2,2], index: 2, kind: output, shape index: {}]
  %s3 = sld [smem:[#allocation0]]
  $region45: #{tpu_custom_call.1} parent=0
    _
  %s5 = ssub.s32 1, %s3
  %s6 = scalar_select 0, %s5, %s3
  $region1: #{tpu_custom_call.1} parent=0
    #allocation2 [shape = 'u8[262144]{0}', space=vmem, size = 0x40000, scoped, tag = 'input window, operand 0']
    #allocation3 [shape = 's32[2]{0}', space=sflag, size = 0x8, scoped, tag = 'scoped memory for tpu_custom_call.1']
    %7 = vsyncpa [#allocation3], 0
    %s8 = scalar_lea.sflag [#allocation3], 1
    %9 = vsyncpa %s8, 0
    loop: start=0, step=1, limit=4
    $region2: #{tpu_custom_call.1} parent=1 // loop_pre_header
      _
    $region3: #{tpu_custom_call.1} parent=1 // loop_header
      %s11 = sphi 0, %s15
      %p12 = scmp.ge.s32.totalorder %s11, 4
      %s21 = sphi 0, %s23
      %s24 = sphi 0, %s21
      %s25 = sphi 0, %s24
      %s41 = sphi 0, %s25
      %s45 = sphi 0, %s45
      %s47 = sphi 0, %s45
      %s48 = sphi 0, %s47
      %s62 = sphi 0, %s48
      %s68 = sphi 0, %s70
      %s71 = sphi 0, %s68
      %s72 = sphi 0, %s71
      %s88 = sphi 0, %s72
    $region4: #{tpu_custom_call.1} parent=1 // loop_header_branch
      %14 = sbr.rel (%p12) target = $region8
    $region5: #{tpu_custom_call.1} parent=1 // loop_body
      %s16 = ssub.s32 %s11, 1
      %s17 = ssub.s32 %s11, 2
      %s18 = sadd.s32 %s11, 1
      %s19 = ssub.s32 %s11, %s18
      %p20 = scmp.eq.s32.totalorder %s19, 0
      %s22 = sadd.s32 %s21, 1
      %s23 = scalar_select %p20, %s21, %s22
      %p26 = pneg %p20
      %p27 = scmp.eq.s32.totalorder %s11, 1
      %p28 = por %p26, %p27
      %p29 = scmp.ne.s32.totalorder %s21, %s24
      %p30 = scmp.eq.s32.totalorder %s11, 0
      %p31 = por %p29, %p30
      %p32 = scmp.ne.s32.totalorder %s21, %s24
      %p33 = scmp.eq.s32.totalorder %s16, 1
      %p34 = por %p32, %p33
      %p35 = scmp.ne.s32.totalorder %s24, %s25
      %p36 = scmp.eq.s32.totalorder %s16, 0
      %p37 = por %p35, %p36
      %p38 = scmp.ne.s32.totalorder %s24, %s25
      %p39 = scmp.eq.s32.totalorder %s17, 1
      %p40 = por %p38, %p39
      %p42 = scmp.ne.s32.totalorder %s25, %s41
      %p43 = scmp.eq.s32.totalorder %s17, 0
      %p44 = por %p42, %p43
      %s46 = sadd.s32 %s45, 1
      %p49 = scmp.eq.s32.totalorder %s11, 1
      %p50 = scmp.ne.s32.totalorder %s45, %s47
      %p51 = scmp.eq.s32.totalorder %s11, 0
      %p52 = por %p50, %p51
      %p53 = scmp.ne.s32.totalorder %s45, %s47
      %p54 = scmp.eq.s32.totalorder %s16, 1
      %p55 = por %p53, %p54
      %p56 = scmp.ne.s32.totalorder %s47, %s48
      %p57 = scmp.eq.s32.totalorder %s16, 0
      %p58 = por %p56, %p57
      %p59 = scmp.ne.s32.totalorder %s47, %s48
      %p60 = scmp.eq.s32.totalorder %s17, 1
      %p61 = por %p59, %p60
      %p63 = scmp.ne.s32.totalorder %s48, %s62
      %p64 = scmp.eq.s32.totalorder %s17, 0
      %p65 = por %p63, %p64
      %s66 = ssub.s32 %s11, %s18
      %p67 = scmp.eq.s32.totalorder %s66, 0
      %s69 = sadd.s32 %s68, 1
      %s70 = scalar_select %p67, %s68, %s69
      %p73 = pneg %p67
      %p74 = scmp.eq.s32.totalorder %s11, 1
      %p75 = por %p73, %p74
      %p76 = scmp.ne.s32.totalorder %s68, %s71
      %p77 = scmp.eq.s32.totalorder %s11, 0
      %p78 = por %p76, %p77
      %p79 = scmp.ne.s32.totalorder %s68, %s71
      %p80 = scmp.eq.s32.totalorder %s16, 1
      %p81 = por %p79, %p80
      %p82 = scmp.ne.s32.totalorder %s71, %s72
      %p83 = scmp.eq.s32.totalorder %s16, 0
      %p84 = por %p82, %p83
      %p85 = scmp.ne.s32.totalorder %s71, %s72
      %p86 = scmp.eq.s32.totalorder %s17, 1
      %p87 = por %p85, %p86
      %p89 = scmp.ne.s32.totalorder %s72, %s88
      %p90 = scmp.eq.s32.totalorder %s17, 0
      %p91 = por %p89, %p90
      %p92 = scmp.le.s32.totalorder 1, %s11
      %p93 = scmp.lt.s32.totalorder %s11, 3
      %p94 = pnand %p92, %p93
      %p95 = pneg %p94
      // Predicated region
      $region9: #{tpu_custom_call.1} parent=5 // pred_check
        _
      $region10: #{tpu_custom_call.1} parent=5 // pred_check_branch
        %97 = sbr.rel (%p94) target = $region12
      $region11: #{tpu_custom_call.1} parent=5 // pred_region
        %s98 = ssub.s32 %s11, 1
        // Predicated region
        $region13: #{tpu_custom_call.1} parent=11 // pred_check
          %p99 = pneg %p58
        $region14: #{tpu_custom_call.1} parent=11 // pred_check_branch
          %101 = sbr.rel (%p99) target = $region16
        $region15: #{tpu_custom_call.1} parent=11 // pred_region
          _
        $region16: #{tpu_custom_call.1} parent=11 // pred_fallthru
          _
      $region12: #{tpu_custom_call.1} parent=5 // pred_fallthru
        _
      %p102 = scmp.lt.s32.totalorder %s11, 2
      // Predicated region
      $region17: #{tpu_custom_call.1} parent=5 // pred_check
        %p103 = pneg %p102
      $region18: #{tpu_custom_call.1} parent=5 // pred_check_branch
        %105 = sbr.rel (%p103) target = $region20
      $region19: #{tpu_custom_call.1} parent=5 // pred_region
        // Predicated region
        $region21: #{tpu_custom_call.1} parent=19 // pred_check
          %p106 = pneg %p31
        $region22: #{tpu_custom_call.1} parent=19 // pred_check_branch
          %108 = sbr.rel (%p106) target = $region24
        $region23: #{tpu_custom_call.1} parent=19 // pred_region
          %s109 = sand.u32 %s21, 1
          %s110 = scalar_lea.sflag [#allocation3], %s109
          %s111 = sand.u32 %s21, 1
          %s112 = smul.addr %s111, 256
          %s113 = scalar_lea.vmem [#allocation2], %s112
          %s114 = smul.u32 4, %s11
          %s116 = ssub.s32 4096, 4096
          %117 = vsyncadd %s110, %s116
          %s118 = smul.addr %s114, 8
          %s119 = smul.addr %s118, 128
          %s120 = scalar_lea.hbm %s0, %s119
          %s121 = sshll.u32 %s113, 4
          %s122 = int_to_ptr.vmem [resolvable:$true] %s121
          %127 = dma.hbm_to_vmem [thread:$0]  %s120, 4096, %s122, %s110, 128, 128, 8
        $region24: #{tpu_custom_call.1} parent=19 // pred_fallthru
          _
      $region20: #{tpu_custom_call.1} parent=5 // pred_fallthru
        _
      %p128 = scmp.le.s32.totalorder 1, %s11
      %p129 = scmp.lt.s32.totalorder %s11, 3
      %p130 = pnand %p128, %p129
      %p131 = pneg %p130
      // Predicated region
      $region25: #{tpu_custom_call.1} parent=5 // pred_check
        _
      $region26: #{tpu_custom_call.1} parent=5 // pred_check_branch
        %133 = sbr.rel (%p130) target = $region28
      $region27: #{tpu_custom_call.1} parent=5 // pred_region
        %s134 = ssub.s32 %s11, 1
        %s135 = sand.u32 %s24, 1
        %s136 = scalar_lea.sflag [#allocation3], %s135
        %s137 = sand.u32 %s24, 1
        %s138 = smul.addr %s137, 256
        %s139 = scalar_lea.vmem [#allocation2], %s138
        // Predicated region
        $region29: #{tpu_custom_call.1} parent=27 // pred_check
          %p140 = pneg %p37
        $region30: #{tpu_custom_call.1} parent=27 // pred_check_branch
          %142 = sbr.rel (%p140) target = $region32
        $region31: #{tpu_custom_call.1} parent=27 // pred_region
          %143 = dma.done %s136, 4096
        $region32: #{tpu_custom_call.1} parent=27 // pred_fallthru
          _
        %s144 = sand.u32 %s24, 1
        %s145 = scalar_lea.sflag [#allocation3], %s144
        %s146 = sand.u32 %s24, 1
        %s147 = smul.addr %s146, 256
        %s148 = scalar_lea.vmem [#allocation2], %s147
        %p149 = pneg %p37
        %p150 = pneg %p34
        %p151 = pneg %p58
        %p152 = pneg %p55
        %p153 = pneg %p84
        %p154 = pneg %p81
        %s155 = smul.u32 4, %s16
        %p156 = scmp.lt.s32.totalorder %s155, 7
        %s157 = scalar_select %p156, %s155, 7
        %s158 = smul.addr %s157, 2
        %s159 = scalar_lea.vmem %s2, %s158
        %s160 = smul.u32 4, %s16
        %s161 = smul.u32 4, %s16
        %p162 = scmp.lt.s32.totalorder %s161, 7
        %s163 = scalar_select %p162, %s161, 7
        %s164 = smul.addr %s163, 2
        %s165 = scalar_lea.vmem %s2, %s164
        %s166 = smul.u32 4, %s16
        %v167 = vld [vmem:[%s139] sm:$0xff]
        %v168 = vld [vmem:[%s139 + $0x8] sm:$0xff]
        %v169 = vld [vmem:[%s139 + $0x10] sm:$0xff]
        %v170 = vld [vmem:[%s139 + $0x18] sm:$0xff]
        %v171 = vld [vmem:[%s139 + $0x20] sm:$0xff]
        %v172 = vld [vmem:[%s139 + $0x28] sm:$0xff]
        %v173 = vld [vmem:[%s139 + $0x30] sm:$0xff]
        %v174 = vld [vmem:[%s139 + $0x38] sm:$0xff]
        %v175 = vld [vmem:[%s139 + $0x40] sm:$0xff]
        %v176 = vld [vmem:[%s139 + $0x48] sm:$0xff]
        %v177 = vld [vmem:[%s139 + $0x50] sm:$0xff]
        %v178 = vld [vmem:[%s139 + $0x58] sm:$0xff]
        %v179 = vld [vmem:[%s139 + $0x60] sm:$0xff]
        %v180 = vld [vmem:[%s139 + $0x68] sm:$0xff]
        %v181 = vld [vmem:[%s139 + $0x70] sm:$0xff]
        %v182 = vld [vmem:[%s139 + $0x78] sm:$0xff]
        %v183 = vld [vmem:[%s139 + $0x80] sm:$0xff]
        %v184 = vld [vmem:[%s139 + $0x88] sm:$0xff]
        %v185 = vld [vmem:[%s139 + $0x90] sm:$0xff]
        %v186 = vld [vmem:[%s139 + $0x98] sm:$0xff]
        %v187 = vld [vmem:[%s139 + $0xa0] sm:$0xff]
        %v188 = vld [vmem:[%s139 + $0xa8] sm:$0xff]
        %v189 = vld [vmem:[%s139 + $0xb0] sm:$0xff]
        %v190 = vld [vmem:[%s139 + $0xb8] sm:$0xff]
        %v191 = vld [vmem:[%s139 + $0xc0] sm:$0xff]
        %v192 = vld [vmem:[%s139 + $0xc8] sm:$0xff]
        %v193 = vld [vmem:[%s139 + $0xd0] sm:$0xff]
        %v194 = vld [vmem:[%s139 + $0xd8] sm:$0xff]
        %v195 = vld [vmem:[%s139 + $0xe0] sm:$0xff]
        %v196 = vld [vmem:[%s139 + $0xe8] sm:$0xff]
        %v197 = vld [vmem:[%s139 + $0xf0] sm:$0xff]
        %v198 = vld [vmem:[%s139 + $0xf8] sm:$0xff]
        %v199 = vld [vmem:[%s1] sm:$0xff]
        %v200 = vld [vmem:[%s1 + $0x8] sm:$0xff]
        %v201 = vld [vmem:[%s1 + $0x10] sm:$0xff]
        %v202 = vld [vmem:[%s1 + $0x18] sm:$0xff]
        %v203 = vld [vmem:[%s1 + $0x20] sm:$0xff]
        %v204 = vld [vmem:[%s1 + $0x28] sm:$0xff]
        %v205 = vld [vmem:[%s1 + $0x30] sm:$0xff]
        %v206 = vld [vmem:[%s1 + $0x38] sm:$0xff]
        %vm207 = vcmask 523264
        %v209 = vsel %vm207, %v167, 0
        %v212 = vsel %vm207, %v168, 0
        %v215 = vsel %vm207, %v169, 0
        %v218 = vsel %vm207, %v170, 0
        %v221 = vsel %vm207, %v171, 0
        %v224 = vsel %vm207, %v172, 0
        %v227 = vsel %vm207, %v173, 0
        %v230 = vsel %vm207, %v174, 0
        %v233 = vsel %vm207, %v175, 0
        %v236 = vsel %vm207, %v176, 0
        %v239 = vsel %vm207, %v177, 0
        %v242 = vsel %vm207, %v178, 0
        %v245 = vsel %vm207, %v179, 0
        %v248 = vsel %vm207, %v180, 0
        %v251 = vsel %vm207, %v181, 0
        %v254 = vsel %vm207, %v182, 0
        %v257 = vsel %vm207, %v183, 0
        %v260 = vsel %vm207, %v184, 0
        %v263 = vsel %vm207, %v185, 0
        %v266 = vsel %vm207, %v186, 0
        %v269 = vsel %vm207, %v187, 0
        %v272 = vsel %vm207, %v188, 0
        %v275 = vsel %vm207, %v189, 0
        %v278 = vsel %vm207, %v190, 0
        %v281 = vsel %vm207, %v191, 0
        %v284 = vsel %vm207, %v192, 0
        %v287 = vsel %vm207, %v193, 0
        %v290 = vsel %vm207, %v194, 0
        %v293 = vsel %vm207, %v195, 0
        %v296 = vsel %vm207, %v196, 0
        %v299 = vsel %vm207, %v197, 0
        %v302 = vsel %vm207, %v198, 0
        %304 = vmatprep.subr.mxu0 0.0
        %305 = vmatpush1.msra.mxu0 %v199
        %306 = vmatprep.subr.mxu0 0.0
        %307 = vmatpush1.msra.mxu0 %v200
        %308 = vmatprep.subr.mxu0 0.0
        %309 = vmatpush1.msra.mxu0 %v201
        %310 = vmatprep.subr.mxu0 0.0
        %311 = vmatpush1.msra.mxu0 %v202
        %312 = vmatprep.subr.mxu0 0.0
        %313 = vmatpush1.msra.mxu0 %v203
        %314 = vmatprep.subr.mxu0 0.0
        %315 = vmatpush1.msra.mxu0 %v204
        %316 = vmatprep.subr.mxu0 0.0
        %317 = vmatpush1.msra.mxu0 %v205
        %318 = vmatprep.subr.mxu0 0.0
        %319 = vmatpush1.msra.mxu0 %v206
        %320 = vmatprep.subr.mxu0 0.0
        %321 = vmatpush1.msra.mxu0 0.0
        %322 = vmatprep.subr.mxu0 0.0
        %323 = vmatpush1.msra.mxu0 0.0
        %324 = vmatprep.subr.mxu0 0.0
        %325 = vmatpush1.msra.mxu0 0.0
        %326 = vmatprep.subr.mxu0 0.0
        %327 = vmatpush1.msra.mxu0 0.0
        %328 = vmatprep.subr.mxu0 0.0
        %329 = vmatpush1.msra.mxu0 0.0
        %330 = vmatprep.subr.mxu0 0.0
        %331 = vmatpush1.msra.mxu0 0.0
        %332 = vmatprep.subr.mxu0 0.0
        %333 = vmatpush1.msra.mxu0 0.0
        %334 = vmatprep.subr.mxu0 0.0
        %335 = vmatpush1.msra.mxu0 0.0
        %336 = vmatprep.subr.mxu0 0.0
        %337 = vmatpush1.msra.mxu0 0.0
        %338 = vmatprep.subr.mxu0 0.0
        %339 = vmatpush1.msra.mxu0 0.0
        %340 = vmatprep.subr.mxu0 0.0
        %341 = vmatpush1.msra.mxu0 0.0
        %342 = vmatprep.subr.mxu0 0.0
        %343 = vmatpush1.msra.mxu0 0.0
        %344 = vmatprep.subr.mxu0 0.0
        %345 = vmatpush1.msra.mxu0 0.0
        %346 = vmatprep.subr.mxu0 0.0
        %347 = vmatpush1.msra.mxu0 0.0
        %348 = vmatprep.subr.mxu0 0.0
        %349 = vmatpush1.msra.mxu0 0.0
        %350 = vmatprep.subr.mxu0 0.0
        %351 = vmatpush1.msra.mxu0 0.0
        %352 = vmatprep.subr.mxu0 0.0
        %353 = vmatpush1.msra.mxu0 0.0
        %354 = vmatprep.subr.mxu0 0.0
        %355 = vmatpush1.msra.mxu0 0.0
        %356 = vmatprep.subr.mxu0 0.0
        %357 = vmatpush1.msra.mxu0 0.0
        %358 = vmatprep.subr.mxu0 0.0
        %359 = vmatpush1.msra.mxu0 0.0
        %360 = vmatprep.subr.mxu0 0.0
        %361 = vmatpush1.msra.mxu0 0.0
        %362 = vmatprep.subr.mxu0 0.0
        %363 = vmatpush1.msra.mxu0 0.0
        %364 = vmatprep.subr.mxu0 0.0
        %365 = vmatpush1.msra.mxu0 0.0
        %366 = vmatprep.subr.mxu0 0.0
        %367 = vmatpush1.msra.mxu0 0.0
        %368 = vmatprep.mubr.f32.mxu0 0.0
        %369 = vmatmul.mubr.f32.gmra.mrb[0].mxu0 %v209
        %v370 = vpop.f32.mrb[0].mxu0
        %v371 = vadd.f32 0.0, %v370
        %v372 = vpop.f32.mrb[0].mxu0
        %373 = vmatprep.mubr.f32.mxu0 0.0
        %374 = vmatmul.mubr.f32.gmra.mrb[0].mxu0 %v212
        %v375 = vpop.f32.mrb[0].mxu0
        %v376 = vadd.f32 0.0, %v375
        %v377 = vpop.f32.mrb[0].mxu0
        %378 = vmatprep.mubr.f32.mxu0 0.0
        %379 = vmatmul.mubr.f32.gmra.mrb[0].mxu0 %v215
        %v380 = vpop.f32.mrb[0].mxu0
        %v381 = vadd.f32 0.0, %v380
        %v382 = vpop.f32.mrb[0].mxu0
        %383 = vmatprep.mubr.f32.mxu0 0.0
        %384 = vmatmul.mubr.f32.gmra.mrb[0].mxu0 %v218
        %v385 = vpop.f32.mrb[0].mxu0
        %v386 = vadd.f32 0.0, %v385
        %v387 = vpop.f32.mrb[0].mxu0
        %388 = vmatprep.mubr.f32.mxu0 0.0
        %389 = vmatmul.mubr.f32.gmra.mrb[0].mxu0 %v221
        %v390 = vpop.f32.mrb[0].mxu0
        %v391 = vadd.f32 0.0, %v390
        %v392 = vpop.f32.mrb[0].mxu0
        %393 = vmatprep.mubr.f32.mxu0 0.0
        %394 = vmatmul.mubr.f32.gmra.mrb[0].mxu0 %v224
        %v395 = vpop.f32.mrb[0].mxu0
        %v396 = vadd.f32 0.0, %v395
        %v397 = vpop.f32.mrb[0].mxu0
        %398 = vmatprep.mubr.f32.mxu0 0.0
        %399 = vmatmul.mubr.f32.gmra.mrb[0].mxu0 %v227
        %v400 = vpop.f32.mrb[0].mxu0
        %v401 = vadd.f32 0.0, %v400
        %v402 = vpop.f32.mrb[0].mxu0
        %403 = vmatprep.mubr.f32.mxu0 0.0
        %404 = vmatmul.mubr.f32.gmra.mrb[0].mxu0 %v230
        %v405 = vpop.f32.mrb[0].mxu0
        %v406 = vadd.f32 0.0, %v405
        %v407 = vpop.f32.mrb[0].mxu0
        %408 = vmatprep.mubr.f32.mxu0 0.0
        %409 = vmatmul.mubr.f32.gmra.mrb[0].mxu0 %v233
        %v410 = vpop.f32.mrb[0].mxu0
        %v411 = vadd.f32 0.0, %v410
        %v412 = vpop.f32.mrb[0].mxu0
        %413 = vmatprep.mubr.f32.mxu0 0.0
        %414 = vmatmul.mubr.f32.gmra.mrb[0].mxu0 %v236
        %v415 = vpop.f32.mrb[0].mxu0
        %v416 = vadd.f32 0.0, %v415
        %v417 = vpop.f32.mrb[0].mxu0
        %418 = vmatprep.mubr.f32.mxu0 0.0
        %419 = vmatmul.mubr.f32.gmra.mrb[0].mxu0 %v239
        %v420 = vpop.f32.mrb[0].mxu0
        %v421 = vadd.f32 0.0, %v420
        %v422 = vpop.f32.mrb[0].mxu0
        %423 = vmatprep.mubr.f32.mxu0 0.0
        %424 = vmatmul.mubr.f32.gmra.mrb[0].mxu0 %v242
        %v425 = vpop.f32.mrb[0].mxu0
        %v426 = vadd.f32 0.0, %v425
        %v427 = vpop.f32.mrb[0].mxu0
        %428 = vmatprep.mubr.f32.mxu0 0.0
        %429 = vmatmul.mubr.f32.gmra.mrb[0].mxu0 %v245
        %v430 = vpop.f32.mrb[0].mxu0
        %v431 = vadd.f32 0.0, %v430
        %v432 = vpop.f32.mrb[0].mxu0
        %433 = vmatprep.mubr.f32.mxu0 0.0
        %434 = vmatmul.mubr.f32.gmra.mrb[0].mxu0 %v248
        %v435 = vpop.f32.mrb[0].mxu0
        %v436 = vadd.f32 0.0, %v435
        %v437 = vpop.f32.mrb[0].mxu0
        %438 = vmatprep.mubr.f32.mxu0 0.0
        %439 = vmatmul.mubr.f32.gmra.mrb[0].mxu0 %v251
        %v440 = vpop.f32.mrb[0].mxu0
        %v441 = vadd.f32 0.0, %v440
        %v442 = vpop.f32.mrb[0].mxu0
        %443 = vmatprep.mubr.f32.mxu0 0.0
        %444 = vmatmul.mubr.f32.gmra.mrb[0].mxu0 %v254
        %v445 = vpop.f32.mrb[0].mxu0
        %v446 = vadd.f32 0.0, %v445
        %v447 = vpop.f32.mrb[0].mxu0
        %448 = vmatprep.mubr.f32.mxu0 0.0
        %449 = vmatmul.mubr.f32.gmra.mrb[0].mxu0 %v257
        %v450 = vpop.f32.mrb[0].mxu0
        %v451 = vadd.f32 0.0, %v450
        %v452 = vpop.f32.mrb[0].mxu0
        %453 = vmatprep.mubr.f32.mxu0 0.0
        %454 = vmatmul.mubr.f32.gmra.mrb[0].mxu0 %v260
        %v455 = vpop.f32.mrb[0].mxu0
        %v456 = vadd.f32 0.0, %v455
        %v457 = vpop.f32.mrb[0].mxu0
        %458 = vmatprep.mubr.f32.mxu0 0.0
        %459 = vmatmul.mubr.f32.gmra.mrb[0].mxu0 %v263
        %v460 = vpop.f32.mrb[0].mxu0
        %v461 = vadd.f32 0.0, %v460
        %v462 = vpop.f32.mrb[0].mxu0
        %463 = vmatprep.mubr.f32.mxu0 0.0
        %464 = vmatmul.mubr.f32.gmra.mrb[0].mxu0 %v266
        %v465 = vpop.f32.mrb[0].mxu0
        %v466 = vadd.f32 0.0, %v465
        %v467 = vpop.f32.mrb[0].mxu0
        %468 = vmatprep.mubr.f32.mxu0 0.0
        %469 = vmatmul.mubr.f32.gmra.mrb[0].mxu0 %v269
        %v470 = vpop.f32.mrb[0].mxu0
        %v471 = vadd.f32 0.0, %v470
        %v472 = vpop.f32.mrb[0].mxu0
        %473 = vmatprep.mubr.f32.mxu0 0.0
        %474 = vmatmul.mubr.f32.gmra.mrb[0].mxu0 %v272
        %v475 = vpop.f32.mrb[0].mxu0
        %v476 = vadd.f32 0.0, %v475
        %v477 = vpop.f32.mrb[0].mxu0
        %478 = vmatprep.mubr.f32.mxu0 0.0
        %479 = vmatmul.mubr.f32.gmra.mrb[0].mxu0 %v275
        %v480 = vpop.f32.mrb[0].mxu0
        %v481 = vadd.f32 0.0, %v480
        %v482 = vpop.f32.mrb[0].mxu0
        %483 = vmatprep.mubr.f32.mxu0 0.0
        %484 = vmatmul.mubr.f32.gmra.mrb[0].mxu0 %v278
        %v485 = vpop.f32.mrb[0].mxu0
        %v486 = vadd.f32 0.0, %v485
        %v487 = vpop.f32.mrb[0].mxu0
        %488 = vmatprep.mubr.f32.mxu0 0.0
        %489 = vmatmul.mubr.f32.gmra.mrb[0].mxu0 %v281
        %v490 = vpop.f32.mrb[0].mxu0
        %v491 = vadd.f32 0.0, %v490
        %v492 = vpop.f32.mrb[0].mxu0
        %493 = vmatprep.mubr.f32.mxu0 0.0
        %494 = vmatmul.mubr.f32.gmra.mrb[0].mxu0 %v284
        %v495 = vpop.f32.mrb[0].mxu0
        %v496 = vadd.f32 0.0, %v495
        %v497 = vpop.f32.mrb[0].mxu0
        %498 = vmatprep.mubr.f32.mxu0 0.0
        %499 = vmatmul.mubr.f32.gmra.mrb[0].mxu0 %v287
        %v500 = vpop.f32.mrb[0].mxu0
        %v501 = vadd.f32 0.0, %v500
        %v502 = vpop.f32.mrb[0].mxu0
        %503 = vmatprep.mubr.f32.mxu0 0.0
        %504 = vmatmul.mubr.f32.gmra.mrb[0].mxu0 %v290
        %v505 = vpop.f32.mrb[0].mxu0
        %v506 = vadd.f32 0.0, %v505
        %v507 = vpop.f32.mrb[0].mxu0
        %508 = vmatprep.mubr.f32.mxu0 0.0
        %509 = vmatmul.mubr.f32.gmra.mrb[0].mxu0 %v293
        %v510 = vpop.f32.mrb[0].mxu0
        %v511 = vadd.f32 0.0, %v510
        %v512 = vpop.f32.mrb[0].mxu0
        %513 = vmatprep.mubr.f32.mxu0 0.0
        %514 = vmatmul.mubr.f32.gmra.mrb[0].mxu0 %v296
        %v515 = vpop.f32.mrb[0].mxu0
        %v516 = vadd.f32 0.0, %v515
        %v517 = vpop.f32.mrb[0].mxu0
        %518 = vmatprep.mubr.f32.mxu0 0.0
        %519 = vmatmul.mubr.f32.gmra.mrb[0].mxu0 %v299
        %v520 = vpop.f32.mrb[0].mxu0
        %v521 = vadd.f32 0.0, %v520
        %v522 = vpop.f32.mrb[0].mxu0
        %523 = vmatprep.mubr.f32.mxu0 0.0
        %524 = vmatmul.mubr.f32.gmra.mrb[0].mxu0 %v302
        %v525 = vpop.f32.mrb[0].mxu0
        %v526 = vadd.f32 0.0, %v525
        %v527 = vpop.f32.mrb[0].mxu0
        %528 = vdwg.mxu0
        %vm529 = vcmask 15360
        %v530 = vsel %vm529, %v371, 0.0
        %v531 = vsel %vm529, %v376, 0.0
        %v532 = vadd.f32 %v530, %v531
        %v533 = vsel %vm529, %v381, 0.0
        %v534 = vadd.f32 %v532, %v533
        %v535 = vsel %vm529, %v386, 0.0
        %v536 = vadd.f32 %v534, %v535
        %v537 = vrot.slane %v536, 4
        %v538 = vadd.f32 %v536, %v537
        %v539 = vrot.slane %v538, 2
        %v540 = vadd.f32 %v538, %v539
        %v541 = vrot.slane %v540, 1
        %v542 = vadd.f32 %v540, %v541
        %v543 = vsel %vm529, %v391, 0.0
        %v544 = vsel %vm529, %v396, 0.0
        %v545 = vadd.f32 %v543, %v544
        %v546 = vsel %vm529, %v401, 0.0
        %v547 = vadd.f32 %v545, %v546
        %v548 = vsel %vm529, %v406, 0.0
        %v549 = vadd.f32 %v547, %v548
        %v550 = vrot.slane %v549, 4
        %v551 = vadd.f32 %v549, %v550
        %v552 = vrot.slane %v551, 2
        %v553 = vadd.f32 %v551, %v552
        %v554 = vrot.slane %v553, 1
        %v555 = vadd.f32 %v553, %v554
        %v556 = vsel %vm529, %v411, 0.0
        %v557 = vsel %vm529, %v416, 0.0
        %v558 = vadd.f32 %v556, %v557
        %v559 = vsel %vm529, %v421, 0.0
        %v560 = vadd.f32 %v558, %v559
        %v561 = vsel %vm529, %v426, 0.0
        %v562 = vadd.f32 %v560, %v561
        %v563 = vrot.slane %v562, 4
        %v564 = vadd.f32 %v562, %v563
        %v565 = vrot.slane %v564, 2
        %v566 = vadd.f32 %v564, %v565
        %v567 = vrot.slane %v566, 1
        %v568 = vadd.f32 %v566, %v567
        %v569 = vsel %vm529, %v431, 0.0
        %v570 = vsel %vm529, %v436, 0.0
        %v571 = vadd.f32 %v569, %v570
        %v572 = vsel %vm529, %v441, 0.0
        %v573 = vadd.f32 %v571, %v572
        %v574 = vsel %vm529, %v446, 0.0
        %v575 = vadd.f32 %v573, %v574
        %v576 = vrot.slane %v575, 4
        %v577 = vadd.f32 %v575, %v576
        %v578 = vrot.slane %v577, 2
        %v579 = vadd.f32 %v577, %v578
        %v580 = vrot.slane %v579, 1
        %v581 = vadd.f32 %v579, %v580
        %v582 = vsel %vm529, %v451, 0.0
        %v583 = vsel %vm529, %v456, 0.0
        %v584 = vadd.f32 %v582, %v583
        %v585 = vsel %vm529, %v461, 0.0
        %v586 = vadd.f32 %v584, %v585
        %v587 = vsel %vm529, %v466, 0.0
        %v588 = vadd.f32 %v586, %v587
        %v589 = vrot.slane %v588, 4
        %v590 = vadd.f32 %v588, %v589
        %v591 = vrot.slane %v590, 2
        %v592 = vadd.f32 %v590, %v591
        %v593 = vrot.slane %v592, 1
        %v594 = vadd.f32 %v592, %v593
        %v595 = vsel %vm529, %v471, 0.0
        %v596 = vsel %vm529, %v476, 0.0
        %v597 = vadd.f32 %v595, %v596
        %v598 = vsel %vm529, %v481, 0.0
        %v599 = vadd.f32 %v597, %v598
        %v600 = vsel %vm529, %v486, 0.0
        %v601 = vadd.f32 %v599, %v600
        %v602 = vrot.slane %v601, 4
        %v603 = vadd.f32 %v601, %v602
        %v604 = vrot.slane %v603, 2
        %v605 = vadd.f32 %v603, %v604
        %v606 = vrot.slane %v605, 1
        %v607 = vadd.f32 %v605, %v606
        %v608 = vsel %vm529, %v491, 0.0
        %v609 = vsel %vm529, %v496, 0.0
        %v610 = vadd.f32 %v608, %v609
        %v611 = vsel %vm529, %v501, 0.0
        %v612 = vadd.f32 %v610, %v611
        %v613 = vsel %vm529, %v506, 0.0
        %v614 = vadd.f32 %v612, %v613
        %v615 = vrot.slane %v614, 4
        %v616 = vadd.f32 %v614, %v615
        %v617 = vrot.slane %v616, 2
        %v618 = vadd.f32 %v616, %v617
        %v619 = vrot.slane %v618, 1
        %v620 = vadd.f32 %v618, %v619
        %v621 = vsel %vm529, %v511, 0.0
        %v622 = vsel %vm529, %v516, 0.0
        %v623 = vadd.f32 %v621, %v622
        %v624 = vsel %vm529, %v521, 0.0
        %v625 = vadd.f32 %v623, %v624
        %v626 = vsel %vm529, %v526, 0.0
        %v627 = vadd.f32 %v625, %v626
        %v628 = vrot.slane %v627, 4
        %v629 = vadd.f32 %v627, %v628
        %v630 = vrot.slane %v629, 2
        %v631 = vadd.f32 %v629, %v630
        %v632 = vrot.slane %v631, 1
        %v633 = vadd.f32 %v631, %v632
        %vm642 = vcmask 1041409
        %v643 = vsel %vm642, %v555, %v542
        %v644 = vsel %vm642, %v581, %v568
        %v645 = vsel %vm642, %v607, %v594
        %v646 = vsel %vm642, %v633, %v620
        %vm651 = vcmask 9216
        %652 = vst.msk [vmem:[%s165] sm:$0x3] %vm651, %v643
        %653 = vst.msk [vmem:[%s165 + $0x2] sm:$0x3] %vm651, %v644
        %654 = vst.msk [vmem:[%s165 + $0x4] sm:$0x3] %vm651, %v645
        %655 = vst.msk [vmem:[%s165 + $0x6] sm:$0x3] %vm651, %v646
        %s656 = smul.u32 4, %s16
        %p657 = scmp.lt.s32.totalorder %s656, 7
        %s658 = scalar_select %p657, %s656, 7
        %s659 = smul.addr %s658, 2
        %s660 = scalar_lea.vmem %s2, %s659
        // Predicated region
        $region33: #{tpu_custom_call.1} parent=27 // pred_check
          %p661 = pneg %p81
        $region34: #{tpu_custom_call.1} parent=27 // pred_check_branch
          %663 = sbr.rel (%p661) target = $region36
        $region35: #{tpu_custom_call.1} parent=27 // pred_region
          %s664 = smul.u32 4, %s16
        $region36: #{tpu_custom_call.1} parent=27 // pred_fallthru
          _
      $region28: #{tpu_custom_call.1} parent=5 // pred_fallthru
        _
      %p665 = scmp.le.s32.totalorder 2, %s11
      // Predicated region
      $region37: #{tpu_custom_call.1} parent=5 // pred_check
        %p666 = pneg %p665
      $region38: #{tpu_custom_call.1} parent=5 // pred_check_branch
        %668 = sbr.rel (%p666) target = $region40
      $region39: #{tpu_custom_call.1} parent=5 // pred_region
        %s669 = ssub.s32 %s11, 2
        // Predicated region
        $region41: #{tpu_custom_call.1} parent=39 // pred_check
          %p670 = pneg %p87
        $region42: #{tpu_custom_call.1} parent=39 // pred_check_branch
          %672 = sbr.rel (%p670) target = $region44
        $region43: #{tpu_custom_call.1} parent=39 // pred_region
          %s673 = smul.u32 4, %s17
          %p674 = scmp.lt.s32.totalorder %s673, 7
          %s675 = scalar_select %p674, %s673, 7
          %s676 = smul.addr %s675, 2
          %s677 = scalar_lea.vmem %s2, %s676
        $region44: #{tpu_custom_call.1} parent=39 // pred_fallthru
          _
      $region40: #{tpu_custom_call.1} parent=5 // pred_fallthru
        _
    $region6: #{tpu_custom_call.1} parent=1 // loop_footer
      %s15 = sadd.s32 1, %s11
    $region7: #{tpu_custom_call.1} parent=1 // loop_footer_branch
      %10 = sbr.rel target = $region3
    $region8: #{tpu_custom_call.1} parent=1 // loop_exit
      _
    %678 = vsyncpa [#allocation3], 1
    %s679 = scalar_lea.sflag [#allocation3], 1
    %680 = vsyncpa %s679, 1

</llo_original>
